<compile_context>
chip_gen: v5e
topology: v5e:2x2
jax: 0.10.0
libtpu: 0.0.40
codegen_flags: <defaults>
</compile_context>

<pallas_src>
import functools

import jax
import jax.numpy as jnp
from jax.experimental import pallas as pl
from jax.experimental.pallas import tpu as pltpu


def _round_up(a, m):
    return -(-a // m) * m


def _cdiv(a, b):
    return -(-a // b)


def _ted_conv1d_kernel(x_ref, w_ref, b_ref, o_ref, *, k_max, wc):
    """One grid step = one chunk of Nb batch rows folded into the lane axis.

    x_ref : (1, C_in, Win)         Win = wc + k_max - 1; zero-padded per-batch segments
                                   (length Lp) laid back-to-back on lanes.
    w_ref : (k_max, O_pad, C_in)   fused (zero-padded, centered), pre-clamped weights.
    b_ref : (O_pad, 1)             fused bias.
    o_ref : (1, O_pad, wc)         lane-dense output chunk (wc multiple of 128,
                                   O_pad multiple of 8).
    """
    xv = x_ref[0]                                              # (C_in, Win)
    acc = jnp.dot(w_ref[0], xv[:, 0:wc],                       # (O_pad, wc) f32 accum
                  preferred_element_type=jnp.float32) + b_ref[...]
    for t in range(1, k_max):                                  # small static tap loop -> MXU
        acc += jnp.dot(w_ref[t], xv[:, t:t + wc],
                       preferred_element_type=jnp.float32)
    o_ref[0] = acc.astype(o_ref.dtype)


def ted_conv1d(x, weights, biases, kernels, *, padding_mode="zeros", target_lanes=512):
    """x: (N, C_in, L).  weights[i]: (oc_i, C_in, k_i).  biases[i]: (oc_i,)."""
    N, C_in, L = x.shape
    kernels = tuple(int(k) for k in kernels)
    assert all(k % 2 == 1 for k in kernels), \
        "torch.cat(dim=-2) needs equal branch lengths -> odd kernel sizes only"
    out_channels = tuple(int(w.shape[0]) for w in weights)
    O_total = sum(out_channels)
    O_pad = _round_up(O_total, 8)                  # sublane-aligned output channels
    k_max = max(kernels)
    max_pad = (k_max - 1) // 2
    Lp = L + 2 * max_pad

    # ---- fused weights: zero-pad each branch to k_max taps (centered) + clamp once ----
    parts = []
    for w, k in zip(weights, kernels):
        off = (k_max - k) // 2                      # centers branch-k taps inside k_max
        parts.append(jnp.pad(w.astype(jnp.float32),
                             ((0, 0), (0, 0), (off, k_max - k - off))))
    w_fused = jnp.concatenate(parts, axis=0)                         # (O_total, C_in, k_max)
    w_fused = jnp.clip(w_fused, -1.0, 1.0)                           # ConstrainedConv1d clamp
    w_fused = jnp.pad(w_fused, ((0, O_pad - O_total), (0, 0), (0, 0)))
    w_taps = jnp.transpose(w_fused, (2, 0, 1))                       # (k_max, O_pad, C_in)
    b_fused = jnp.concatenate([b.astype(jnp.float32) for b in biases])
    b_fused = jnp.pad(b_fused, (0, O_pad - O_total)).reshape(O_pad, 1)

    # ---- batch chunking: fold Nb rows into lanes; keep >=2 grid steps; VMEM guard ----
    nb = max(1, min(N, target_lanes // Lp))
    if N > 1 and _cdiv(N, nb) < 2:                  # keep both v7x TensorCores busy
        nb = _cdiv(N, 2)
    while nb > 1 and 2 * 4 * (C_in + O_pad) * (_round_up(nb * Lp, 128) + k_max) > (8 << 20):
        nb //= 2                                    # double-buffered blocks well under scoped VMEM
    G = _cdiv(N, nb)
    wc = _round_up(nb * Lp, 128)                    # lane-dense output width -> unmasked vst
    win = wc + k_max - 1

    # ---- layout plumbing: pad per batch, fold batch into lanes, zero-pad lane tail ----
    if padding_mode == "zeros":                     # faithful to the overridden forward
        x_pad = jnp.pad(x, ((0, 0), (0, 0), (max_pad, max_pad)))
    else:                                           # the constructor's (ignored) intent
        assert L > max_pad, "reflect padding requires L > max_pad"
        x_pad = jnp.pad(x, ((0, 0), (0, 0), (max_pad, max_pad)), mode="reflect")
    if G * nb > N:
        x_pad = jnp.pad(x_pad, ((0, G * nb - N), (0, 0), (0, 0)))
    xc = x_pad.reshape(G, nb, C_in, Lp).transpose(0, 2, 1, 3).reshape(G, C_in, nb * Lp)
    xc = jnp.pad(xc, ((0, 0), (0, 0), (0, win - nb * Lp)))           # (G, C_in, Win)

    kernel = functools.partial(_ted_conv1d_kernel, k_max=k_max, wc=wc)

    out = pl.pallas_call(
        kernel,
        out_shape=jax.ShapeDtypeStruct((G, O_pad, wc), x.dtype),
        grid=(G,),
        in_specs=[
            pl.BlockSpec((1, C_in, win), lambda g: (g, 0, 0)),
            pl.BlockSpec((k_max, O_pad, C_in), lambda g: (0, 0, 0)),
            pl.BlockSpec((O_pad, 1), lambda g: (0, 0)),
        ],
        out_specs=pl.BlockSpec((1, O_pad, wc), lambda g: (g, 0, 0)),
        compiler_params=pltpu.CompilerParams(dimension_semantics=("parallel",)),
    )(xc, w_taps, b_fused)

    # ---- un-plumb: (G, O_pad, wc) -> (N, O_total, L); pad/garbage rows+cols dropped ----
    y = out[:, :O_total, :nb * Lp].reshape(G, O_total, nb, Lp)[:, :, :, :L]
    y = y.transpose(0, 2, 1, 3).reshape(G * nb, O_total, L)[:N]
    return y


def ted_conv1d_reference(x, weights, biases, kernels, *, padding_mode="zeros"):
    """Pure-JAX reference mirroring the PyTorch forward (overridden ConstrainedConv1d)."""
    outs = []
    for w, b, k in zip(weights, biases, kernels):
        pad = (k - 1) // 2
        mode = "constant" if padding_mode == "zeros" else "reflect"
        xp = jnp.pad(x, ((0, 0), (0, 0), (pad, pad)), mode=mode)
        wcl = jnp.clip(w, -1.0, 1.0)
        y = jax.lax.conv_general_dilated(
            xp, wcl, window_strides=(1,), padding="VALID",
            dimension_numbers=("NCH", "OIH", "NCH"),
        )
        outs.append(y + b[None, :, None])
    return jnp.concatenate(outs, axis=-2)


if __name__ == "__main__":
    # Small shapes consistent with the module: batch=2, in_channels=4, length=16.
    N, C_in, L = 2, 4, 16
    kernels = [1, 3, 5]          # odd sizes so branch output lengths match for the concat
    out_channels = [2, 3, 3]

    key = jax.random.PRNGKey(0)
    kx, *kws = jax.random.split(key, 1 + 2 * len(kernels))

    x = jax.random.normal(kx, (N, C_in, L), dtype=jnp.float32)

    weights, biases = [], []
    for i, (k, oc) in enumerate(zip(kernels, out_channels)):
        kw, kb = kws[2 * i], kws[2 * i + 1]
        # Scale weights so some fall outside [-1, 1] and the clamp is actually exercised.
        w = 3.0 * jax.random.normal(kw, (oc, C_in, k), dtype=jnp.float32)
        b = jax.random.normal(kb, (oc,), dtype=jnp.float32)
        weights.append(w)
        biases.append(b)

    out = ted_conv1d(x, weights, biases, kernels)
    out = jax.block_until_ready(out)

    ref = ted_conv1d_reference(x, weights, biases, kernels)
    assert out.shape == (N, sum(out_channels), L), out.shape
    assert jnp.allclose(out, ref, atol=1e-5, rtol=1e-5), (
        float(jnp.max(jnp.abs(out - ref)))
    )

    print("KERNEL_OK")
</pallas_src>

<mosaic_0001>
module attributes {stable_mosaic.version = 11 : i64} {
  func.func @_ted_conv1d_kernel(%arg0: i32, %arg1: memref<1x4x132xf32, #tpu.memory_space<vmem>>, %arg2: memref<5x8x4xf32, #tpu.memory_space<vmem>>, %arg3: memref<8x1xf32, #tpu.memory_space<vmem>>, %arg4: memref<1x8x128xf32, #tpu.memory_space<vmem>>) attributes {dimension_semantics = [#tpu.dimension_semantics<parallel>], iteration_bounds = array<i64: 2>, scalar_prefetch = 0 : i64, scratch_operands = 0 : i64, tpu.core_type = #tpu.core_type<tc>, window_params = [{transform_indices = @transform_0, window_bounds = array<i64: 1, 4, 132>}, {pipeline_mode = #tpu.pipeline_mode<synchronous>, transform_indices = @transform_1, window_bounds = array<i64: 5, 8, 4>}, {pipeline_mode = #tpu.pipeline_mode<synchronous>, transform_indices = @transform_2, window_bounds = array<i64: 8, 1>}, {transform_indices = @transform_3, window_bounds = array<i64: 1, 8, 128>}]} {
    %c0 = arith.constant 0 : index
    %c0_0 = arith.constant 0 : index
    %c0_1 = arith.constant 0 : index
    %0 = vector.load %arg1[%c0, %c0_0, %c0_1] : memref<1x4x132xf32, #tpu.memory_space<vmem>>, vector<1x4x132xf32>
    %1 = vector.shape_cast %0 : vector<1x4x132xf32> to vector<4x132xf32>
    %c0_2 = arith.constant 0 : index
    %c0_3 = arith.constant 0 : index
    %c0_4 = arith.constant 0 : index
    %2 = vector.load %arg2[%c0_2, %c0_3, %c0_4] : memref<5x8x4xf32, #tpu.memory_space<vmem>>, vector<1x8x4xf32>
    %3 = vector.shape_cast %2 : vector<1x8x4xf32> to vector<8x4xf32>
    %4 = vector.extract_strided_slice %1 {offsets = [0, 0], sizes = [4, 128], strides = [1, 1]} : vector<4x132xf32> to vector<4x128xf32>
    %cst = arith.constant dense<0.000000e+00> : vector<8x128xf32>
    %5 = tpu.matmul %3, %4, %cst {dimension_numbers = #tpu.dot_dimension_numbers<[1], [0], [0], [1], [0, 0, 1, 1], [], []>} : vector<8x4xf32>, vector<4x128xf32>, vector<8x128xf32> -> vector<8x128xf32>
    %c0_5 = arith.constant 0 : index
    %c0_6 = arith.constant 0 : index
    %6 = vector.load %arg3[%c0_5, %c0_6] : memref<8x1xf32, #tpu.memory_space<vmem>>, vector<8x1xf32>
    %7 = vector.broadcast %6 : vector<8x1xf32> to vector<8x128xf32>
    %8 = arith.addf %5, %7 : vector<8x128xf32>
    %c1 = arith.constant 1 : index
    %c0_7 = arith.constant 0 : index
    %c0_8 = arith.constant 0 : index
    %9 = vector.load %arg2[%c1, %c0_7, %c0_8] : memref<5x8x4xf32, #tpu.memory_space<vmem>>, vector<1x8x4xf32>
    %10 = vector.shape_cast %9 : vector<1x8x4xf32> to vector<8x4xf32>
    %11 = vector.extract_strided_slice %1 {offsets = [0, 1], sizes = [4, 128], strides = [1, 1]} : vector<4x132xf32> to vector<4x128xf32>
    %cst_9 = arith.constant dense<0.000000e+00> : vector<8x128xf32>
    %12 = tpu.matmul %10, %11, %cst_9 {dimension_numbers = #tpu.dot_dimension_numbers<[1], [0], [0], [1], [0, 0, 1, 1], [], []>} : vector<8x4xf32>, vector<4x128xf32>, vector<8x128xf32> -> vector<8x128xf32>
    %13 = arith.addf %8, %12 : vector<8x128xf32>
    %c2 = arith.constant 2 : index
    %c0_10 = arith.constant 0 : index
    %c0_11 = arith.constant 0 : index
    %14 = vector.load %arg2[%c2, %c0_10, %c0_11] : memref<5x8x4xf32, #tpu.memory_space<vmem>>, vector<1x8x4xf32>
    %15 = vector.shape_cast %14 : vector<1x8x4xf32> to vector<8x4xf32>
    %16 = vector.extract_strided_slice %1 {offsets = [0, 2], sizes = [4, 128], strides = [1, 1]} : vector<4x132xf32> to vector<4x128xf32>
    %cst_12 = arith.constant dense<0.000000e+00> : vector<8x128xf32>
    %17 = tpu.matmul %15, %16, %cst_12 {dimension_numbers = #tpu.dot_dimension_numbers<[1], [0], [0], [1], [0, 0, 1, 1], [], []>} : vector<8x4xf32>, vector<4x128xf32>, vector<8x128xf32> -> vector<8x128xf32>
    %18 = arith.addf %13, %17 : vector<8x128xf32>
    %c3 = arith.constant 3 : index
    %c0_13 = arith.constant 0 : index
    %c0_14 = arith.constant 0 : index
    %19 = vector.load %arg2[%c3, %c0_13, %c0_14] : memref<5x8x4xf32, #tpu.memory_space<vmem>>, vector<1x8x4xf32>
    %20 = vector.shape_cast %19 : vector<1x8x4xf32> to vector<8x4xf32>
    %21 = vector.extract_strided_slice %1 {offsets = [0, 3], sizes = [4, 128], strides = [1, 1]} : vector<4x132xf32> to vector<4x128xf32>
    %cst_15 = arith.constant dense<0.000000e+00> : vector<8x128xf32>
    %22 = tpu.matmul %20, %21, %cst_15 {dimension_numbers = #tpu.dot_dimension_numbers<[1], [0], [0], [1], [0, 0, 1, 1], [], []>} : vector<8x4xf32>, vector<4x128xf32>, vector<8x128xf32> -> vector<8x128xf32>
    %23 = arith.addf %18, %22 : vector<8x128xf32>
    %c4 = arith.constant 4 : index
    %c0_16 = arith.constant 0 : index
    %c0_17 = arith.constant 0 : index
    %24 = vector.load %arg2[%c4, %c0_16, %c0_17] : memref<5x8x4xf32, #tpu.memory_space<vmem>>, vector<1x8x4xf32>
    %25 = vector.shape_cast %24 : vector<1x8x4xf32> to vector<8x4xf32>
    %26 = vector.extract_strided_slice %1 {offsets = [0, 4], sizes = [4, 128], strides = [1, 1]} : vector<4x132xf32> to vector<4x128xf32>
    %cst_18 = arith.constant dense<0.000000e+00> : vector<8x128xf32>
    %27 = tpu.matmul %25, %26, %cst_18 {dimension_numbers = #tpu.dot_dimension_numbers<[1], [0], [0], [1], [0, 0, 1, 1], [], []>} : vector<8x4xf32>, vector<4x128xf32>, vector<8x128xf32> -> vector<8x128xf32>
    %28 = arith.addf %23, %27 : vector<8x128xf32>
    %c0_19 = arith.constant 0 : index
    %c0_20 = arith.constant 0 : index
    %c0_21 = arith.constant 0 : index
    %29 = vector.load %arg4[%c0_19, %c0_20, %c0_21] : memref<1x8x128xf32, #tpu.memory_space<vmem>>, vector<1x8x128xf32>
    %30 = vector.shape_cast %29 : vector<1x8x128xf32> to vector<8x128xf32>
    %31 = vector.shape_cast %28 : vector<8x128xf32> to vector<1x8x128xf32>
    tpu.vector_store %arg4[%c0_19, %c0_20, %c0_21], %31 {strides = array<i32>} : memref<1x8x128xf32, #tpu.memory_space<vmem>>, vector<1x8x128xf32>,
    return
  }
  func.func @transform_0(%arg0: i32) -> (i32, i32, i32) {
    %c0_i32 = arith.constant 0 : i32
    %c0_i32_0 = arith.constant 0 : i32
    %c0_i32_1 = arith.constant 0 : i32
    return %arg0, %c0_i32, %c0_i32_0 : i32, i32, i32
  }
  func.func @transform_1(%arg0: i32) -> (i32, i32, i32) {
    %c0_i32 = arith.constant 0 : i32
    %c0_i32_0 = arith.constant 0 : i32
    %c0_i32_1 = arith.constant 0 : i32
    %c0_i32_2 = arith.constant 0 : i32
    return %c0_i32, %c0_i32_0, %c0_i32_1 : i32, i32, i32
  }
  func.func @transform_2(%arg0: i32) -> (i32, i32) {
    %c0_i32 = arith.constant 0 : i32
    %c0_i32_0 = arith.constant 0 : i32
    %c0_i32_1 = arith.constant 0 : i32
    return %c0_i32, %c0_i32_0 : i32, i32
  }
  func.func @transform_3(%arg0: i32) -> (i32, i32, i32) {
    %c0_i32 = arith.constant 0 : i32
    %c0_i32_0 = arith.constant 0 : i32
    %c0_i32_1 = arith.constant 0 : i32
    return %arg0, %c0_i32, %c0_i32_0 : i32, i32, i32
  }
}

</mosaic_0001>

<llo_original>
// kernel: tpu_custom_call.1
$region0: #{tpu_custom_call.1}
  #allocation0 [shape = 'u32[]', space=smem, size = 0x4, offset = 0x4, fixed_abs, tag = 'smem constant byte address 0x4 - core index']
  #allocation1 [shape = 'u32[72,128]{1,0:T(1,128)}', space=vmem, size = 0x9000, scoped, tag = 'internal scratch']
  %s0 = inlined_call_operand.vmem [shape: f32[2,4,132], index: 0, kind: input, shape index: {}]
  %s1 = inlined_call_operand.vmem [shape: f32[5,8,4], index: 1, kind: input, shape index: {}]
  %s2 = inlined_call_operand.vmem [shape: f32[8,1], index: 2, kind: input, shape index: {}]
  %s3 = inlined_call_operand.hbm [shape: f32[2,8,128], index: 3, kind: output, shape index: {}]
  %s4 = sld [smem:[#allocation0]]
  $region45: #{tpu_custom_call.1} parent=0
    _
  %s6 = ssub.s32 1, %s4
  %s7 = scalar_select 0, %s6, %s4
  $region1: #{tpu_custom_call.1} parent=0
    #allocation2 [shape = 'u8[8192]{0}', space=vmem, size = 0x2000, scoped, tag = 'output window, operand 0']
    #allocation3 [shape = 's32[2]{0}', space=sflag, size = 0x8, scoped, tag = 'scoped memory for tpu_custom_call.1']
    %8 = vsyncpa [#allocation3], 0
    %s9 = scalar_lea.sflag [#allocation3], 1
    %10 = vsyncpa %s9, 0
    loop: start=0, step=1, limit=4
    $region2: #{tpu_custom_call.1} parent=1 // loop_pre_header
      _
    $region3: #{tpu_custom_call.1} parent=1 // loop_header
      %s12 = sphi 0, %s16
      %p13 = scmp.ge.s32.totalorder %s12, 4
      %s22 = sphi 0, %s24
      %s25 = sphi 0, %s22
      %s26 = sphi 0, %s25
      %s42 = sphi 0, %s26
      %s46 = sphi 0, %s46
      %s48 = sphi 0, %s46
      %s49 = sphi 0, %s48
      %s63 = sphi 0, %s49
      %s67 = sphi 0, %s67
      %s69 = sphi 0, %s67
      %s70 = sphi 0, %s69
      %s84 = sphi 0, %s70
      %s90 = sphi 0, %s92
      %s93 = sphi 0, %s90
      %s94 = sphi 0, %s93
      %s110 = sphi 0, %s94
    $region4: #{tpu_custom_call.1} parent=1 // loop_header_branch
      %15 = sbr.rel (%p13) target = $region8
    $region5: #{tpu_custom_call.1} parent=1 // loop_body
      %s17 = ssub.s32 %s12, 1
      %s18 = ssub.s32 %s12, 2
      %s19 = sadd.s32 %s12, 1
      %s20 = ssub.s32 %s12, %s19
      %p21 = scmp.eq.s32.totalorder %s20, 0
      %s23 = sadd.s32 %s22, 1
      %s24 = scalar_select %p21, %s22, %s23
      %p27 = pneg %p21
      %p28 = scmp.eq.s32.totalorder %s12, 1
      %p29 = por %p27, %p28
      %p30 = scmp.ne.s32.totalorder %s22, %s25
      %p31 = scmp.eq.s32.totalorder %s12, 0
      %p32 = por %p30, %p31
      %p33 = scmp.ne.s32.totalorder %s22, %s25
      %p34 = scmp.eq.s32.totalorder %s17, 1
      %p35 = por %p33, %p34
      %p36 = scmp.ne.s32.totalorder %s25, %s26
      %p37 = scmp.eq.s32.totalorder %s17, 0
      %p38 = por %p36, %p37
      %p39 = scmp.ne.s32.totalorder %s25, %s26
      %p40 = scmp.eq.s32.totalorder %s18, 1
      %p41 = por %p39, %p40
      %p43 = scmp.ne.s32.totalorder %s26, %s42
      %p44 = scmp.eq.s32.totalorder %s18, 0
      %p45 = por %p43, %p44
      %s47 = sadd.s32 %s46, 1
      %p50 = scmp.eq.s32.totalorder %s12, 1
      %p51 = scmp.ne.s32.totalorder %s46, %s48
      %p52 = scmp.eq.s32.totalorder %s12, 0
      %p53 = por %p51, %p52
      %p54 = scmp.ne.s32.totalorder %s46, %s48
      %p55 = scmp.eq.s32.totalorder %s17, 1
      %p56 = por %p54, %p55
      %p57 = scmp.ne.s32.totalorder %s48, %s49
      %p58 = scmp.eq.s32.totalorder %s17, 0
      %p59 = por %p57, %p58
      %p60 = scmp.ne.s32.totalorder %s48, %s49
      %p61 = scmp.eq.s32.totalorder %s18, 1
      %p62 = por %p60, %p61
      %p64 = scmp.ne.s32.totalorder %s49, %s63
      %p65 = scmp.eq.s32.totalorder %s18, 0
      %p66 = por %p64, %p65
      %s68 = sadd.s32 %s67, 1
      %p71 = scmp.eq.s32.totalorder %s12, 1
      %p72 = scmp.ne.s32.totalorder %s67, %s69
      %p73 = scmp.eq.s32.totalorder %s12, 0
      %p74 = por %p72, %p73
      %p75 = scmp.ne.s32.totalorder %s67, %s69
      %p76 = scmp.eq.s32.totalorder %s17, 1
      %p77 = por %p75, %p76
      %p78 = scmp.ne.s32.totalorder %s69, %s70
      %p79 = scmp.eq.s32.totalorder %s17, 0
      %p80 = por %p78, %p79
      %p81 = scmp.ne.s32.totalorder %s69, %s70
      %p82 = scmp.eq.s32.totalorder %s18, 1
      %p83 = por %p81, %p82
      %p85 = scmp.ne.s32.totalorder %s70, %s84
      %p86 = scmp.eq.s32.totalorder %s18, 0
      %p87 = por %p85, %p86
      %s88 = ssub.s32 %s12, %s19
      %p89 = scmp.eq.s32.totalorder %s88, 0
      %s91 = sadd.s32 %s90, 1
      %s92 = scalar_select %p89, %s90, %s91
      %p95 = pneg %p89
      %p96 = scmp.eq.s32.totalorder %s12, 1
      %p97 = por %p95, %p96
      %p98 = scmp.ne.s32.totalorder %s90, %s93
      %p99 = scmp.eq.s32.totalorder %s12, 0
      %p100 = por %p98, %p99
      %p101 = scmp.ne.s32.totalorder %s90, %s93
      %p102 = scmp.eq.s32.totalorder %s17, 1
      %p103 = por %p101, %p102
      %p104 = scmp.ne.s32.totalorder %s93, %s94
      %p105 = scmp.eq.s32.totalorder %s17, 0
      %p106 = por %p104, %p105
      %p107 = scmp.ne.s32.totalorder %s93, %s94
      %p108 = scmp.eq.s32.totalorder %s18, 1
      %p109 = por %p107, %p108
      %p111 = scmp.ne.s32.totalorder %s94, %s110
      %p112 = scmp.eq.s32.totalorder %s18, 0
      %p113 = por %p111, %p112
      %p114 = scmp.le.s32.totalorder 1, %s12
      %p115 = scmp.lt.s32.totalorder %s12, 3
      %p116 = pnand %p114, %p115
      %p117 = pneg %p116
      // Predicated region
      $region9: #{tpu_custom_call.1} parent=5 // pred_check
        _
      $region10: #{tpu_custom_call.1} parent=5 // pred_check_branch
        %119 = sbr.rel (%p116) target = $region12
      $region11: #{tpu_custom_call.1} parent=5 // pred_region
        %s120 = ssub.s32 %s12, 1
        // Predicated region
        $region13: #{tpu_custom_call.1} parent=11 // pred_check
          %p121 = pneg %p59
        $region14: #{tpu_custom_call.1} parent=11 // pred_check_branch
          %123 = sbr.rel (%p121) target = $region16
        $region15: #{tpu_custom_call.1} parent=11 // pred_region
          _
        $region16: #{tpu_custom_call.1} parent=11 // pred_fallthru
          _
        // Predicated region
        $region17: #{tpu_custom_call.1} parent=11 // pred_check
          %p124 = pneg %p80
        $region18: #{tpu_custom_call.1} parent=11 // pred_check_branch
          %126 = sbr.rel (%p124) target = $region20
        $region19: #{tpu_custom_call.1} parent=11 // pred_region
          _
        $region20: #{tpu_custom_call.1} parent=11 // pred_fallthru
          _
      $region12: #{tpu_custom_call.1} parent=5 // pred_fallthru
        _
      %p127 = scmp.lt.s32.totalorder %s12, 2
      // Predicated region
      $region21: #{tpu_custom_call.1} parent=5 // pred_check
        %p128 = pneg %p127
      $region22: #{tpu_custom_call.1} parent=5 // pred_check_branch
        %130 = sbr.rel (%p128) target = $region24
      $region23: #{tpu_custom_call.1} parent=5 // pred_region
        // Predicated region
        $region25: #{tpu_custom_call.1} parent=23 // pred_check
          %p131 = pneg %p32
        $region26: #{tpu_custom_call.1} parent=23 // pred_check_branch
          %133 = sbr.rel (%p131) target = $region28
        $region27: #{tpu_custom_call.1} parent=23 // pred_region
          %p134 = scmp.lt.s32.totalorder %s12, 1
          %s135 = scalar_select %p134, %s12, 1
          %s136 = smul.addr %s135, 2
          %s137 = smul.addr %s136, 4
          %s138 = scalar_lea.vmem %s0, %s137
        $region28: #{tpu_custom_call.1} parent=23 // pred_fallthru
          _
      $region24: #{tpu_custom_call.1} parent=5 // pred_fallthru
        _
      %p139 = scmp.le.s32.totalorder 1, %s12
      %p140 = scmp.lt.s32.totalorder %s12, 3
      %p141 = pnand %p139, %p140
      %p142 = pneg %p141
      // Predicated region
      $region29: #{tpu_custom_call.1} parent=5 // pred_check
        _
      $region30: #{tpu_custom_call.1} parent=5 // pred_check_branch
        %144 = sbr.rel (%p141) target = $region32
      $region31: #{tpu_custom_call.1} parent=5 // pred_region
        %s145 = ssub.s32 %s12, 1
        %p146 = scmp.lt.s32.totalorder %s17, 1
        %s147 = scalar_select %p146, %s17, 1
        %s148 = smul.addr %s147, 2
        %s149 = smul.addr %s148, 4
        %s150 = scalar_lea.vmem %s0, %s149
        %p151 = pneg %p38
        %p152 = pneg %p35
        %p153 = pneg %p59
        %p154 = pneg %p56
        %p155 = pneg %p80
        %p156 = pneg %p77
        %p157 = pneg %p106
        %p158 = pneg %p103
        %s159 = sand.u32 %s93, 1
        %s160 = scalar_lea.sflag [#allocation3], %s159
        %s161 = sand.u32 %s93, 1
        %s162 = smul.addr %s161, 8
        %s163 = scalar_lea.vmem [#allocation2], %s162
        %p164 = scmp.lt.s32.totalorder %s17, 1
        %s165 = scalar_select %p164, %s17, 1
        %s166 = smul.addr %s165, 2
        %s167 = smul.addr %s166, 4
        %s168 = scalar_lea.vmem %s0, %s167
        %v169 = vld [vmem:[%s168] sm:$0xff]
        %v170 = vld [vmem:[%s1] sm:$0xff]
        %v171 = vld [vmem:[%s2] sm:$0xff]
        %173 = vset.pattern.permute.xlu0 0
        %174 = vperm.xlu0 %173, %v171
        %v175 = vpop.permute.xlu0 %174
        %vm177 = vcmask 31744
        %v179 = vsel %vm177, %v170, 0
        %vm181 = vcmask 1043456
        %v183 = vsel %vm181, %v169, 0
        %185 = vmatpush.msra.mxu0 0.0
        %186 = vmatpush.msra.mxu0 0.0
        %187 = vmatpush.msra.mxu0 0.0
        %188 = vmatpush.msra.mxu0 0.0
        %189 = vmatpush.msra.mxu0 0.0
        %190 = vmatpush.msra.mxu0 0.0
        %191 = vmatpush.msra.mxu0 0.0
        %192 = vmatpush.msra.mxu0 0.0
        %193 = vmatpush.msra.mxu0 0.0
        %194 = vmatpush.msra.mxu0 0.0
        %195 = vmatpush.msra.mxu0 0.0
        %196 = vmatpush.msra.mxu0 0.0
        %197 = vmatpush.msra.mxu0 0.0
        %198 = vmatpush.msra.mxu0 0.0
        %199 = vmatpush.msra.mxu0 0.0
        %200 = vmatpush.msra.mxu0 %v183
        %201 = vmatmul.f32.gmra.mxu0 %v179
        %v202 = vpop.f32.mrf.mxu0
        %v203 = vadd.f32 %v175, %v202
        %204 = vdwg.mxu0
        %s205 = scalar_lea.vmem %s1, 8
        %v206 = vld [vmem:[%s205] sm:$0xff]
        %207 = vst [vmem:[#allocation1] ss:$2 sm:$0xff] %v169
        %v208 = vld.sshfl [vmem:[#allocation1] sm:$0xff pattern:$0x75316420]
        %v209 = vld.sshfl [vmem:[#allocation1 + $0x8] sm:$0xff pattern:$0x75316420]
        %210 = vrot.lane.b32.xlu0 %v208, 127
        %v211 = vpop.permute.xlu0 %210
        %212 = vrot.lane.b32.xlu0 %v209, 127
        %v213 = vpop.permute.xlu0 %212
        %vm214 = vcmask 1039360
        %v215 = vsel %vm214, %v211, %v213
        %v217 = vsel %vm177, %v206, 0
        %v219 = vsel %vm181, %v215, 0
        %221 = vmatpush.msra.mxu0 0.0
        %222 = vmatpush.msra.mxu0 0.0
        %223 = vmatpush.msra.mxu0 0.0
        %224 = vmatpush.msra.mxu0 0.0
        %225 = vmatpush.msra.mxu0 0.0
        %226 = vmatpush.msra.mxu0 0.0
        %227 = vmatpush.msra.mxu0 0.0
        %228 = vmatpush.msra.mxu0 0.0
        %229 = vmatpush.msra.mxu0 0.0
        %230 = vmatpush.msra.mxu0 0.0
        %231 = vmatpush.msra.mxu0 0.0
        %232 = vmatpush.msra.mxu0 0.0
        %233 = vmatpush.msra.mxu0 0.0
        %234 = vmatpush.msra.mxu0 0.0
        %235 = vmatpush.msra.mxu0 0.0
        %236 = vmatpush.msra.mxu0 %v219
        %237 = vmatmul.f32.gmra.mxu0 %v217
        %v238 = vpop.f32.mrf.mxu0
        %v239 = vadd.f32 0.0, %v238
        %240 = vdwg.mxu0
        %v241 = vadd.f32 %v203, %v239
        %s242 = scalar_lea.vmem %s1, 16
        %v243 = vld [vmem:[%s242] sm:$0xff]
        %244 = vst [vmem:[#allocation1] ss:$2 sm:$0xff] %v169
        %v245 = vld.sshfl [vmem:[#allocation1] sm:$0xff pattern:$0x75316420]
        %v246 = vld.sshfl [vmem:[#allocation1 + $0x8] sm:$0xff pattern:$0x75316420]
        %247 = vrot.lane.b32.xlu0 %v245, 126
        %v248 = vpop.permute.xlu0 %247
        %249 = vrot.lane.b32.xlu0 %v246, 126
        %v250 = vpop.permute.xlu0 %249
        %vm251 = vcmask 1031168
        %v252 = vsel %vm251, %v248, %v250
        %v254 = vsel %vm177, %v243, 0
        %v256 = vsel %vm181, %v252, 0
        %258 = vmatpush.msra.mxu0 0.0
        %259 = vmatpush.msra.mxu0 0.0
        %260 = vmatpush.msra.mxu0 0.0
        %261 = vmatpush.msra.mxu0 0.0
        %262 = vmatpush.msra.mxu0 0.0
        %263 = vmatpush.msra.mxu0 0.0
        %264 = vmatpush.msra.mxu0 0.0
        %265 = vmatpush.msra.mxu0 0.0
        %266 = vmatpush.msra.mxu0 0.0
        %267 = vmatpush.msra.mxu0 0.0
        %268 = vmatpush.msra.mxu0 0.0
        %269 = vmatpush.msra.mxu0 0.0
        %270 = vmatpush.msra.mxu0 0.0
        %271 = vmatpush.msra.mxu0 0.0
        %272 = vmatpush.msra.mxu0 0.0
        %273 = vmatpush.msra.mxu0 %v256
        %274 = vmatmul.f32.gmra.mxu0 %v254
        %v275 = vpop.f32.mrf.mxu0
        %v276 = vadd.f32 0.0, %v275
        %277 = vdwg.mxu0
        %v278 = vadd.f32 %v241, %v276
        %s279 = scalar_lea.vmem %s1, 24
        %v280 = vld [vmem:[%s279] sm:$0xff]
        %281 = vst [vmem:[#allocation1] ss:$2 sm:$0xff] %v169
        %v282 = vld.sshfl [vmem:[#allocation1] sm:$0xff pattern:$0x75316420]
        %v283 = vld.sshfl [vmem:[#allocation1 + $0x8] sm:$0xff pattern:$0x75316420]
        %284 = vrot.lane.b32.xlu0 %v282, 125
        %v285 = vpop.permute.xlu0 %284
        %286 = vrot.lane.b32.xlu0 %v283, 125
        %v287 = vpop.permute.xlu0 %286
        %vm288 = vcmask 1022976
        %v289 = vsel %vm288, %v285, %v287
        %v291 = vsel %vm177, %v280, 0
        %v293 = vsel %vm181, %v289, 0
        %295 = vmatpush.msra.mxu0 0.0
        %296 = vmatpush.msra.mxu0 0.0
        %297 = vmatpush.msra.mxu0 0.0
        %298 = vmatpush.msra.mxu0 0.0
        %299 = vmatpush.msra.mxu0 0.0
        %300 = vmatpush.msra.mxu0 0.0
        %301 = vmatpush.msra.mxu0 0.0
        %302 = vmatpush.msra.mxu0 0.0
        %303 = vmatpush.msra.mxu0 0.0
        %304 = vmatpush.msra.mxu0 0.0
        %305 = vmatpush.msra.mxu0 0.0
        %306 = vmatpush.msra.mxu0 0.0
        %307 = vmatpush.msra.mxu0 0.0
        %308 = vmatpush.msra.mxu0 0.0
        %309 = vmatpush.msra.mxu0 0.0
        %310 = vmatpush.msra.mxu0 %v293
        %311 = vmatmul.f32.gmra.mxu0 %v291
        %v312 = vpop.f32.mrf.mxu0
        %v313 = vadd.f32 0.0, %v312
        %314 = vdwg.mxu0
        %v315 = vadd.f32 %v278, %v313
        %s316 = scalar_lea.vmem %s1, 32
        %v317 = vld [vmem:[%s316] sm:$0xff]
        %318 = vst [vmem:[#allocation1] ss:$2 sm:$0xff] %v169
        %v319 = vld.sshfl [vmem:[#allocation1] sm:$0xff pattern:$0x75316420]
        %v320 = vld.sshfl [vmem:[#allocation1 + $0x8] sm:$0xff pattern:$0x75316420]
        %321 = vrot.lane.b32.xlu0 %v319, 124
        %v322 = vpop.permute.xlu0 %321
        %323 = vrot.lane.b32.xlu0 %v320, 124
        %v324 = vpop.permute.xlu0 %323
        %vm325 = vcmask 1014784
        %v326 = vsel %vm325, %v322, %v324
        %v328 = vsel %vm177, %v317, 0
        %v330 = vsel %vm181, %v326, 0
        %332 = vmatpush.msra.mxu0 0.0
        %333 = vmatpush.msra.mxu0 0.0
        %334 = vmatpush.msra.mxu0 0.0
        %335 = vmatpush.msra.mxu0 0.0
        %336 = vmatpush.msra.mxu0 0.0
        %337 = vmatpush.msra.mxu0 0.0
        %338 = vmatpush.msra.mxu0 0.0
        %339 = vmatpush.msra.mxu0 0.0
        %340 = vmatpush.msra.mxu0 0.0
        %341 = vmatpush.msra.mxu0 0.0
        %342 = vmatpush.msra.mxu0 0.0
        %343 = vmatpush.msra.mxu0 0.0
        %344 = vmatpush.msra.mxu0 0.0
        %345 = vmatpush.msra.mxu0 0.0
        %346 = vmatpush.msra.mxu0 0.0
        %347 = vmatpush.msra.mxu0 %v330
        %348 = vmatmul.f32.gmra.mxu0 %v328
        %v349 = vpop.f32.mrf.mxu0
        %v350 = vadd.f32 0.0, %v349
        %351 = vdwg.mxu0
        %v352 = vadd.f32 %v315, %v350
        %353 = vst [vmem:[%s163] sm:$0xff] %v352
        %s354 = sand.u32 %s93, 1
        %s355 = scalar_lea.sflag [#allocation3], %s354
        %s356 = sand.u32 %s93, 1
        %s357 = smul.addr %s356, 8
        %s358 = scalar_lea.vmem [#allocation2], %s357
        // Predicated region
        $region33: #{tpu_custom_call.1} parent=31 // pred_check
          %p359 = pneg %p103
        $region34: #{tpu_custom_call.1} parent=31 // pred_check_branch
          %361 = sbr.rel (%p359) target = $region36
        $region35: #{tpu_custom_call.1} parent=31 // pred_region
          %363 = vsyncadd %s355, 0
          %s364 = smul.addr %s17, 8
          %s365 = scalar_lea.hbm %s3, %s364
          %s367 = sshll.u32 %s358, 4
          %s368 = int_to_ptr.vmem [resolvable:$true] %s367
          %s369 = sshll.u32 %s365, 4
          %s370 = int_to_ptr.hbm [resolvable:$true] %s369
          %372 = dma.vmem_to_hbm [thread:$0]  %s368, 128, %s370, %s355
        $region36: #{tpu_custom_call.1} parent=31 // pred_fallthru
          _
      $region32: #{tpu_custom_call.1} parent=5 // pred_fallthru
        _
      %p373 = scmp.le.s32.totalorder 2, %s12
      // Predicated region
      $region37: #{tpu_custom_call.1} parent=5 // pred_check
        %p374 = pneg %p373
      $region38: #{tpu_custom_call.1} parent=5 // pred_check_branch
        %376 = sbr.rel (%p374) target = $region40
      $region39: #{tpu_custom_call.1} parent=5 // pred_region
        %s377 = ssub.s32 %s12, 2
        // Predicated region
        $region41: #{tpu_custom_call.1} parent=39 // pred_check
          %p378 = pneg %p109
        $region42: #{tpu_custom_call.1} parent=39 // pred_check_branch
          %380 = sbr.rel (%p378) target = $region44
        $region43: #{tpu_custom_call.1} parent=39 // pred_region
          %s381 = sand.u32 %s94, 1
          %s382 = scalar_lea.sflag [#allocation3], %s381
          %s383 = sand.u32 %s94, 1
          %s384 = smul.addr %s383, 8
          %s385 = scalar_lea.vmem [#allocation2], %s384
          %387 = dma.done %s382, 128
        $region44: #{tpu_custom_call.1} parent=39 // pred_fallthru
          _
      $region40: #{tpu_custom_call.1} parent=5 // pred_fallthru
        _
    $region6: #{tpu_custom_call.1} parent=1 // loop_footer
      %s16 = sadd.s32 1, %s12
    $region7: #{tpu_custom_call.1} parent=1 // loop_footer_branch
      %11 = sbr.rel target = $region3
    $region8: #{tpu_custom_call.1} parent=1 // loop_exit
      _
    %388 = vsyncpa [#allocation3], 1
    %s389 = scalar_lea.sflag [#allocation3], 1
    %390 = vsyncpa %s389, 1

</llo_original>
